<compile_context>
chip_gen: v5e
topology: v5e:2x2
jax: 0.10.0
libtpu: 0.0.40
codegen_flags: <defaults>
</compile_context>

<pallas_src>
import functools

import jax
import jax.numpy as jnp
from jax.experimental import pallas as pl
from jax.experimental.pallas import tpu as pltpu

_LANE = 128
_SUBLANE = 8


def make_pe_table(max_seq_len, h_dim, dtype=jnp.float32):
    """Precompute the sinusoidal table exactly like PositionEmbedding.__init__."""
    position = jnp.arange(max_seq_len, dtype=jnp.float32)[:, None]            # (L, 1)
    div_term = jnp.exp(jnp.arange(0, h_dim, 2, dtype=jnp.float32)
                       * (-jnp.log(10000.0) / h_dim))                          # (ceil(H/2),)
    angles = position * div_term                                               # (L, ceil(H/2))
    pe = jnp.zeros((max_seq_len, h_dim), dtype=jnp.float32)
    pe = pe.at[:, 0::2].set(jnp.sin(angles))
    pe = pe.at[:, 1::2].set(jnp.cos(angles[:, : h_dim // 2]))  # odd-H safe
    return pe.astype(dtype)


def _vmem_capacity_bytes():
    """Generation-aware VMEM size (128 MiB v5e/v6e, 64 MiB v7x)."""
    try:
        return int(pltpu.get_tpu_info().vmem_capacity_bytes)
    except Exception:
        return 128 * 1024 * 1024


def _choose_tiles(B, S, H, itemsize, max_tile_bytes):
    """Pick (tile_b, tile_s) from a byte budget. tile_s is a multiple of 8 or full-extent."""
    row_bytes = H * itemsize
    if S <= _SUBLANE:
        tile_s = S  # full-extent second-to-last block dim: always legal
    else:
        rows = max(_SUBLANE, (max_tile_bytes // row_bytes) // _SUBLANE * _SUBLANE)
        tile_s = min(rows, (S // _SUBLANE) * _SUBLANE)
    block_bytes = max(tile_s * row_bytes, 1)
    tile_b = int(min(B, max(1, max_tile_bytes // block_bytes)))
    return tile_b, tile_s


def _pos_embed_kernel(pe_ref, out_ref):
    # pe_ref:  (tile_s, H) slab of the sinusoidal table.
    # out_ref: (tile_b, tile_s, H) slab of the broadcast output.
    out_ref[...] = jnp.broadcast_to(pe_ref[...][None], out_ref.shape)


@functools.partial(jax.jit, static_argnums=(1,))
def _position_embedding_impl(pe_slice, B):
    S, H = pe_slice.shape
    itemsize = pe_slice.dtype.itemsize

    # Lane-dense repacking when H is not a multiple of 128 (avoids masked vst.msk).
    if H % _LANE != 0 and (S * H) % _LANE == 0:
        Sw, Hw = (S * H) // _LANE, _LANE
        pe_work = pe_slice.reshape(Sw, Hw)
    else:
        Sw, Hw = S, H
        pe_work = pe_slice

    vmem_cap = _vmem_capacity_bytes()
    max_tile_bytes = max(vmem_cap // 16, 1 << 20)  # ~8 MiB (v5e/v6e), ~4 MiB (v7x)
    tile_b, tile_s = _choose_tiles(B, Sw, Hw, itemsize, max_tile_bytes)
    num_s = pl.cdiv(Sw, tile_s)
    num_b = pl.cdiv(B, tile_b)

    in_block = tile_s * Hw * itemsize
    out_block = tile_b * in_block
    # 2-deep input buffers + 2-deep output buffers + headroom, capped per generation.
    hard_cap = max(vmem_cap // 2, 32 << 20)
    vmem_limit = int(min(hard_cap, max(2 * (in_block + out_block) + (8 << 20), 32 << 20)))

    out = pl.pallas_call(
        _pos_embed_kernel,
        out_shape=jax.ShapeDtypeStruct((B, Sw, Hw), pe_slice.dtype),
        grid=(num_s, num_b),  # batch innermost -> pe tile is not re-DMA'd as b varies
        in_specs=[pl.BlockSpec((tile_s, Hw), lambda s, b: (s, 0))],
        out_specs=pl.BlockSpec((tile_b, tile_s, Hw), lambda s, b: (b, s, 0)),
        compiler_params=pltpu.CompilerParams(
            dimension_semantics=("parallel", "parallel"),
            vmem_limit_bytes=vmem_limit),
        cost_estimate=pl.CostEstimate(
            flops=0,
            transcendentals=0,
            bytes_accessed=(B * Sw * Hw + Sw * Hw) * itemsize),
    )(pe_work)

    return out.reshape(B, S, H)


def position_embedding(x, pe_table):
    """Pallas equivalent of PositionEmbedding.forward(x) -> (B, S, H)."""
    B, S = x.shape[0], x.shape[1]
    L, H = pe_table.shape
    assert S <= L, f"sequence length {S} exceeds max_seq_len {L}"
    return _position_embedding_impl(pe_table[:S], B)


if __name__ == "__main__":
    # Small, deterministic synthetic setup (no checkpoint load).
    max_seq_len, h_dim = 16, 32
    batch, seq = 2, 8

    key = jax.random.PRNGKey(0)
    pe_table = make_pe_table(max_seq_len, h_dim)
    # forward(x) only consumes x.size(0) and x.size(1); values are irrelevant.
    x = jax.random.normal(key, (batch, seq, h_dim), dtype=jnp.float32)

    out = position_embedding(x, pe_table)
    out = jax.block_until_ready(out)

    # Reference: plain-JAX equivalent of pe[:S].unsqueeze(0).repeat(B, 1, 1).
    ref = jnp.broadcast_to(pe_table[:seq][None], (batch, seq, h_dim))
    assert out.shape == (batch, seq, h_dim)
    assert out.dtype == jnp.float32
    assert jnp.allclose(out, ref), "Pallas position embedding mismatch vs reference"

    # Second check: ragged/odd seq length (exercises the cdiv / masked-store path).
    seq2 = 5
    x2 = jax.random.normal(key, (batch, seq2, h_dim), dtype=jnp.float32)
    out2 = jax.block_until_ready(position_embedding(x2, pe_table))
    ref2 = jnp.broadcast_to(pe_table[:seq2][None], (batch, seq2, h_dim))
    assert jnp.allclose(out2, ref2), "Pallas position embedding mismatch (ragged seq)"

    print("KERNEL_OK")
</pallas_src>

<mosaic_0001>
module attributes {stable_mosaic.version = 11 : i64} {
  func.func @_pos_embed_kernel(%arg0: i32, %arg1: i32, %arg2: memref<2x128xf32, #tpu.memory_space<vmem>>, %arg3: memref<2x2x128xf32, #tpu.memory_space<vmem>>) attributes {dimension_semantics = [#tpu.dimension_semantics<parallel>, #tpu.dimension_semantics<parallel>], iteration_bounds = array<i64: 1, 1>, scalar_prefetch = 0 : i64, scratch_operands = 0 : i64, tpu.core_type = #tpu.core_type<tc>, window_params = [{transform_indices = @transform_0, window_bounds = array<i64: 2, 128>}, {transform_indices = @transform_1, window_bounds = array<i64: 2, 2, 128>}]} {
    %c0 = arith.constant 0 : index
    %c0_0 = arith.constant 0 : index
    %0 = vector.load %arg2[%c0, %c0_0] : memref<2x128xf32, #tpu.memory_space<vmem>>, vector<2x128xf32>
    %1 = vector.shape_cast %0 : vector<2x128xf32> to vector<1x2x128xf32>
    %2 = vector.shape_cast %1 : vector<1x2x128xf32> to vector<1x2x128xf32>
    %3 = vector.broadcast %2 : vector<1x2x128xf32> to vector<2x2x128xf32>
    %c0_1 = arith.constant 0 : index
    %c0_2 = arith.constant 0 : index
    %c0_3 = arith.constant 0 : index
    %4 = vector.load %arg3[%c0_1, %c0_2, %c0_3] : memref<2x2x128xf32, #tpu.memory_space<vmem>>, vector<2x2x128xf32>
    tpu.vector_store %arg3[%c0_1, %c0_2, %c0_3], %3 {strides = array<i32>} : memref<2x2x128xf32, #tpu.memory_space<vmem>>, vector<2x2x128xf32>,
    return
  }
  func.func @transform_0(%arg0: i32, %arg1: i32) -> (i32, i32) {
    %c0_i32 = arith.constant 0 : i32
    %c0_i32_0 = arith.constant 0 : i32
    return %arg0, %c0_i32 : i32, i32
  }
  func.func @transform_1(%arg0: i32, %arg1: i32) -> (i32, i32, i32) {
    %c0_i32 = arith.constant 0 : i32
    %c0_i32_0 = arith.constant 0 : i32
    return %arg1, %arg0, %c0_i32 : i32, i32, i32
  }
}

</mosaic_0001>

<llo_original>
// kernel: _position_embedding_impl.1
$region0: #{_position_embedding_impl.1}
  #allocation0 [shape = 'u32[]', space=smem, size = 0x4, offset = 0x4, fixed_abs, tag = 'smem constant byte address 0x4 - core index']
  #allocation1 [shape = 'u32[72,128]{1,0:T(1,128)}', space=vmem, size = 0x9000, scoped, tag = 'internal scratch']
  %s0 = inlined_call_operand.vmem [shape: f32[2,128], index: 0, kind: input, shape index: {}]
  %s1 = inlined_call_operand.vmem [shape: f32[2,2,128], index: 1, kind: output, shape index: {}]
  %s2 = sld [smem:[#allocation0]]
  $region14: #{_position_embedding_impl.1} parent=0
    _
  %s4 = ssub.s32 1, %s2
  %s5 = scalar_select 0, %s4, %s2
  // Predicated region
  $region2: #{_position_embedding_impl.1} parent=0 // pred_check
    _
  $region3: #{_position_embedding_impl.1} parent=0 // pred_check_branch
    %7 = sbr.rel (0) target = $region5
  $region4: #{_position_embedding_impl.1} parent=0 // pred_region
    _
  $region5: #{_position_embedding_impl.1} parent=0 // pred_fallthru
    _
  %v8 = vld [vmem:[%s0] sm:$0x3]
  %9 = vst [vmem:[%s1] sm:$0x3] %v8
  %10 = vst [vmem:[%s1 + $0x2] sm:$0x3] %v8
  // Predicated region
  $region6: #{_position_embedding_impl.1} parent=0 // pred_check
    _
  $region7: #{_position_embedding_impl.1} parent=0 // pred_check_branch
    %12 = sbr.rel (0) target = $region9
  $region8: #{_position_embedding_impl.1} parent=0 // pred_region
    _
  $region9: #{_position_embedding_impl.1} parent=0 // pred_fallthru
    _
  // Predicated region
  $region10: #{_position_embedding_impl.1} parent=0 // pred_check
    _
  $region11: #{_position_embedding_impl.1} parent=0 // pred_check_branch
    %14 = sbr.rel (0) target = $region13
  $region12: #{_position_embedding_impl.1} parent=0 // pred_region
    _
  $region13: #{_position_embedding_impl.1} parent=0 // pred_fallthru
    _

</llo_original>
